<compile_context>
chip_gen: v7x
topology: tpu7x:2x2x1
jax: 0.10.0
libtpu: 0.0.40
codegen_flags: <defaults>
</compile_context>

<pallas_src>
import functools

import jax
import jax.numpy as jnp
from jax import lax
from jax.experimental import pallas as pl
from jax.experimental.pallas import tpu as pltpu

LANES = 128
SUBLANES = 8
MAX_BLOCK_ROWS = 4096                  # 4096*128*4 B = 2 MiB per f32 input per buffer
VMEM_LIMIT_BYTES = 32 * 1024 * 1024    # safe on v5e/v6e/v7x; fits 4096-row blocks


def _focal_terms(x, t, *, alpha, gamma, binary_targets):
    """Elementwise focal loss from logits (matches torch BCE-with-logits)."""
    x = x.astype(jnp.float32)
    t = t.astype(jnp.float32)
    # Numerically stable BCE-with-logits: max(x, 0) - x*t + log1p(exp(-|x|))
    e = jnp.exp(-jnp.abs(x))
    bce = jnp.maximum(x, 0.0) - x * t + jnp.log1p(e)
    if binary_targets:
        # pt = sigmoid(x) if t==1 else 1-sigmoid(x); exact identity for t in {0,1}.
        # Reuses e = exp(-|x|): saves one EUP exp per element vs exp(-bce).
        same = (x >= 0.0) == (t >= 0.5)
        pt = jnp.where(same, 1.0, e) / (1.0 + e)
    else:
        pt = jnp.exp(-bce)
    q = 1.0 - pt
    g = float(gamma)
    if g == 2.0:
        mod = q * q                    # explicit square: no EUP pow, no NaN for q < 0
    elif g == 1.0:
        mod = q
    elif g.is_integer() and g >= 0.0:
        mod = lax.integer_pow(q, int(g))
    else:
        # Clamp: q can round slightly negative; float pow would NaN on a negative base.
        mod = jnp.power(jnp.maximum(q, 0.0), g)
    return (float(alpha) * mod) * bce


def _focal_partial_sum_kernel(x_ref, t_ref, out_ref, *, alpha, gamma,
                              binary_targets, n_elem, block_rows, mask_needed):
    focal = _focal_terms(x_ref[...], t_ref[...], alpha=alpha, gamma=gamma,
                         binary_targets=binary_targets)
    br = block_rows

    def store(f):
        if br % SUBLANES == 0:
            # Full-tile (8,128) partial: leading-dim VPU sum + unmasked store.
            out_ref[...] = (f.reshape(br // SUBLANES, SUBLANES, LANES)
                            .sum(axis=0).reshape(1, SUBLANES, LANES))
        else:
            # Small/odd full-extent block: fall back to a (1,128) partial.
            out_ref[...] = f.sum(axis=0).reshape(1, 1, LANES)

    if not mask_needed:
        store(focal)                   # tile-aligned: no mask anywhere
    else:
        i = pl.program_id(0)
        last = pl.num_programs(0) - 1

        @pl.when(i != last)
        def _():                       # interior blocks: unmasked hot path
            store(focal)

        @pl.when(i == last)
        def _():                       # only the last block can have invalid elems
            row = lax.broadcasted_iota(jnp.int32, focal.shape, 0) + i * br
            col = lax.broadcasted_iota(jnp.int32, focal.shape, 1)
            valid = row * LANES + col < n_elem   # n_elem < 2**31 assumed
            store(jnp.where(valid, focal, 0.0))


def _focal_elementwise_kernel(x_ref, t_ref, out_ref, *, alpha, gamma, binary_targets):
    out_ref[...] = _focal_terms(x_ref[...], t_ref[...], alpha=alpha, gamma=gamma,
                                binary_targets=binary_targets).astype(out_ref.dtype)


def _choose_block_rows(rows, requested):
    if requested is None:
        requested = MAX_BLOCK_ROWS
    br = max(SUBLANES, -(-int(requested) // SUBLANES) * SUBLANES)  # multiple of 8
    if br >= rows:
        return rows                    # single full-extent block (always legal)
    return br


def focal_loss(inputs, targets, alpha=1.0, gamma=2.0, reduction="mean",
               block_rows=None, binary_targets=False):
    """Binary focal loss with logits via Pallas TPU kernels."""
    inputs = jnp.asarray(inputs)
    targets = jnp.asarray(targets)
    if targets.dtype == jnp.bool_:
        targets = targets.astype(jnp.float32)   # avoid i1 refs in the kernel

    # Mirror the PyTorch squeeze-to-match behavior.
    if inputs.ndim > targets.ndim:
        inputs = jnp.squeeze(inputs, axis=-1)
    elif targets.ndim > inputs.ndim:
        targets = jnp.squeeze(targets, axis=-1)
    if inputs.shape != targets.shape:
        raise ValueError(
            f"Target size ({targets.shape}) must be the same as input size "
            f"({inputs.shape})")

    out_dtype = jnp.promote_types(inputs.dtype, targets.dtype)
    if not jnp.issubdtype(out_dtype, jnp.floating):
        out_dtype = jnp.float32

    out_shape_orig = inputs.shape
    n_elem = int(inputs.size)
    flat_x = inputs.reshape(-1)
    flat_t = targets.reshape(-1)

    # Lane-dense 2-D view.  A host pad (copy, native dtype) is only needed when
    # n_elem is not a multiple of 128; the in-kernel mask makes pad values
    # irrelevant.  Aligned sizes are fed with zero wrapper-side copies.
    pad = (-n_elem) % LANES
    if pad:
        flat_x = jnp.pad(flat_x, (0, pad))
        flat_t = jnp.pad(flat_t, (0, pad))
    rows = (n_elem + pad) // LANES
    x2d = flat_x.reshape(rows, LANES)
    t2d = flat_t.reshape(rows, LANES)

    br = _choose_block_rows(rows, block_rows)
    grid = pl.cdiv(rows, br)
    mask_needed = grid * br * LANES > n_elem     # static: lane pad or row overhang

    in_specs = [pl.BlockSpec((br, LANES), lambda i: (i, 0)),
                pl.BlockSpec((br, LANES), lambda i: (i, 0))]
    cparams = pltpu.CompilerParams(dimension_semantics=("parallel",),
                                   vmem_limit_bytes=VMEM_LIMIT_BYTES)

    if reduction == "none":
        focal = pl.pallas_call(
            functools.partial(_focal_elementwise_kernel, alpha=alpha, gamma=gamma,
                              binary_targets=binary_targets),
            out_shape=jax.ShapeDtypeStruct((rows, LANES), out_dtype),
            grid=(grid,),
            in_specs=in_specs,
            out_specs=pl.BlockSpec((br, LANES), lambda i: (i, 0)),
            compiler_params=cparams,
        )(x2d, t2d)
        return focal.reshape(-1)[:n_elem].reshape(out_shape_orig)

    sublane_out = SUBLANES if br % SUBLANES == 0 else 1
    partials = pl.pallas_call(
        functools.partial(_focal_partial_sum_kernel, alpha=alpha, gamma=gamma,
                          binary_targets=binary_targets, n_elem=n_elem,
                          block_rows=br, mask_needed=mask_needed),
        out_shape=jax.ShapeDtypeStruct((grid, sublane_out, LANES), jnp.float32),
        grid=(grid,),
        in_specs=in_specs,
        out_specs=pl.BlockSpec((1, sublane_out, LANES), lambda i: (i, 0, 0)),
        compiler_params=cparams,
    )(x2d, t2d)

    total = jnp.sum(partials)
    if reduction == "sum":
        return total.astype(out_dtype)
    if reduction == "mean":
        return (total / jnp.float32(n_elem)).astype(out_dtype)
    raise ValueError(f"Unknown reduction: {reduction!r}")


def _reference(inputs, targets, alpha=1.0, gamma=2.0, reduction="mean"):
    x = jnp.asarray(inputs, jnp.float32)
    t = jnp.asarray(targets, jnp.float32)
    if x.ndim > t.ndim:
        x = jnp.squeeze(x, axis=-1)
    elif t.ndim > x.ndim:
        t = jnp.squeeze(t, axis=-1)
    bce = jnp.maximum(x, 0.0) - x * t + jnp.log1p(jnp.exp(-jnp.abs(x)))
    pt = jnp.exp(-bce)
    f = alpha * (1.0 - pt) ** gamma * bce
    if reduction == "mean":
        return jnp.mean(f)
    if reduction == "sum":
        return jnp.sum(f)
    return f


if __name__ == "__main__":
    key = jax.random.PRNGKey(0)
    k1, k2, k3, k4, k5, k6 = jax.random.split(key, 6)
    checks = []

    # Case 1: ragged N (not a multiple of 128) -> exercises last-block masking
    # (behind pl.when) and a multi-step grid with row overhang (block_rows=8).
    N1 = 2500
    logits1 = jax.random.normal(k1, (N1, 1), dtype=jnp.float32) * 2.0
    labels1 = (jax.random.uniform(k2, (N1,)) > 0.5).astype(jnp.float32)

    ref_mean1 = _reference(logits1, labels1, reduction="mean")
    ref_sum1 = _reference(logits1, labels1, reduction="sum")
    ref_none1 = _reference(logits1, labels1, reduction="none")

    out_mean1 = focal_loss(logits1, labels1)                       # auto block size
    out_tiled1 = focal_loss(logits1, labels1, block_rows=8)        # multi-step grid
    out_sum1 = focal_loss(logits1, labels1, reduction="sum", block_rows=8)
    out_none1 = focal_loss(logits1, labels1, reduction="none", block_rows=8)
    out_bin1 = focal_loss(logits1, labels1, block_rows=8, binary_targets=True)
    jax.block_until_ready((out_mean1, out_tiled1, out_sum1, out_none1, out_bin1))

    checks.append(bool(jnp.allclose(out_mean1, ref_mean1, rtol=1e-5, atol=1e-6)))
    checks.append(bool(jnp.allclose(out_tiled1, ref_mean1, rtol=1e-5, atol=1e-6)))
    checks.append(bool(jnp.allclose(out_sum1, ref_sum1, rtol=1e-5, atol=1e-4)))
    checks.append(bool(jnp.allclose(out_none1, ref_none1, rtol=1e-5, atol=1e-6)))
    checks.append(bool(jnp.allclose(out_bin1, ref_mean1, rtol=1e-4, atol=1e-5)))

    # Case 2: small, lane-aligned N -> single full-extent block, zero wrapper copies.
    N2 = 512
    logits2 = jax.random.normal(k3, (N2, 1), dtype=jnp.float32) * 2.0
    labels2 = (jax.random.uniform(k4, (N2,)) > 0.5).astype(jnp.float32)

    ref_mean2 = _reference(logits2, labels2, reduction="mean")
    ref_sum2 = _reference(logits2, labels2, reduction="sum")
    ref_none2 = _reference(logits2, labels2, reduction="none")

    out_mean2 = focal_loss(logits2, labels2)
    out_sum2 = focal_loss(logits2, labels2, reduction="sum", block_rows=8)
    out_none2 = focal_loss(logits2, labels2, reduction="none", block_rows=8)
    jax.block_until_ready((out_mean2, out_sum2, out_none2))

    checks.append(bool(jnp.allclose(out_mean2, ref_mean2, rtol=1e-5, atol=1e-6)))
    checks.append(bool(jnp.allclose(out_sum2, ref_sum2, rtol=1e-5, atol=1e-4)))
    checks.append(bool(jnp.allclose(out_none2, ref_none2, rtol=1e-5, atol=1e-6)))

    # Case 3: native bf16 logits/labels -> no host up-cast; cast to f32 in-kernel.
    N3 = 640
    logits3 = (jax.random.normal(k5, (N3, 1)) * 2.0).astype(jnp.bfloat16)
    labels3 = (jax.random.uniform(k6, (N3,)) > 0.5).astype(jnp.bfloat16)
    ref_mean3 = _reference(logits3, labels3, reduction="mean")
    ref_sum3 = _reference(logits3, labels3, reduction="sum")

    out_mean3 = focal_loss(logits3, labels3)
    out_sum3 = focal_loss(logits3, labels3, reduction="sum", block_rows=8)
    jax.block_until_ready((out_mean3, out_sum3))

    checks.append(bool(jnp.allclose(jnp.float32(out_mean3), ref_mean3,
                                    rtol=2e-2, atol=1e-3)))
    checks.append(bool(jnp.allclose(jnp.float32(out_sum3), ref_sum3,
                                    rtol=2e-2, atol=1e-1)))

    assert all(checks), checks
    print("KERNEL_OK")
</pallas_src>

<mosaic_0001>
module attributes {stable_mosaic.version = 11 : i64} {
  func.func @_focal_partial_sum_kernel(%arg0: i32, %arg1: memref<20x128xf32, #tpu.memory_space<vmem>>, %arg2: memref<20x128xf32, #tpu.memory_space<vmem>>, %arg3: memref<1x1x128xf32, #tpu.memory_space<vmem>>) attributes {dimension_semantics = [#tpu.dimension_semantics<parallel>], iteration_bounds = array<i64: 1>, scalar_prefetch = 0 : i64, scratch_operands = 0 : i64, tpu.core_type = #tpu.core_type<tc>, window_params = [{transform_indices = @transform_0, window_bounds = array<i64: 20, 128>}, {transform_indices = @transform_1, window_bounds = array<i64: 20, 128>}, {transform_indices = @transform_2, window_bounds = array<i64: 1, 1, 128>}]} {
    %c0 = arith.constant 0 : index
    %c0_0 = arith.constant 0 : index
    %0 = vector.load %arg1[%c0, %c0_0] : memref<20x128xf32, #tpu.memory_space<vmem>>, vector<20x128xf32>
    %c0_1 = arith.constant 0 : index
    %c0_2 = arith.constant 0 : index
    %1 = vector.load %arg2[%c0_1, %c0_2] : memref<20x128xf32, #tpu.memory_space<vmem>>, vector<20x128xf32>
    %2 = math.absf %0 : vector<20x128xf32>
    %cst = arith.constant 0.000000e+00 : f32
    %3 = vector.broadcast %cst : f32 to vector<20x128xf32>
    %4 = arith.subf %3, %2 : vector<20x128xf32>
    %5 = math.exp %4 : vector<20x128xf32>
    %cst_3 = arith.constant 0.000000e+00 : f32
    %6 = vector.broadcast %cst_3 : f32 to vector<20x128xf32>
    %7 = arith.maximumf %0, %6 : vector<20x128xf32>
    %8 = arith.mulf %0, %1 : vector<20x128xf32>
    %9 = arith.subf %7, %8 : vector<20x128xf32>
    %10 = math.log1p %5 : vector<20x128xf32>
    %11 = arith.addf %9, %10 : vector<20x128xf32>
    %cst_4 = arith.constant 0.000000e+00 : f32
    %12 = vector.broadcast %cst_4 : f32 to vector<20x128xf32>
    %13 = arith.subf %12, %11 : vector<20x128xf32>
    %14 = math.exp %13 : vector<20x128xf32>
    %cst_5 = arith.constant 1.000000e+00 : f32
    %15 = vector.broadcast %cst_5 : f32 to vector<20x128xf32>
    %16 = arith.subf %15, %14 : vector<20x128xf32>
    %17 = arith.mulf %16, %16 : vector<20x128xf32>
    %cst_6 = arith.constant 1.000000e+00 : f32
    %18 = vector.broadcast %cst_6 : f32 to vector<20x128xf32>
    %19 = arith.mulf %18, %17 : vector<20x128xf32>
    %20 = arith.mulf %19, %11 : vector<20x128xf32>
    %c0_i32 = arith.constant 0 : i32
    %21 = arith.cmpi ne, %arg0, %c0_i32 : i32
    %22 = arith.extui %21 : i1 to i32
    %c0_i32_7 = arith.constant 0 : i32
    %23 = arith.cmpi ne, %22, %c0_i32_7 : i32
    scf.if %23 {
      %cst_10 = arith.constant dense<0.000000e+00> : vector<128xf32>
      %27 = vector.multi_reduction <add>, %20, %cst_10 [0] : vector<20x128xf32> to vector<128xf32>
      %28 = vector.shape_cast %27 : vector<128xf32> to vector<1x1x128xf32>
      %c0_11 = arith.constant 0 : index
      %c0_12 = arith.constant 0 : index
      %c0_13 = arith.constant 0 : index
      %29 = vector.load %arg3[%c0_11, %c0_12, %c0_13] : memref<1x1x128xf32, #tpu.memory_space<vmem>>, vector<1x1x128xf32>
      tpu.vector_store %arg3[%c0_11, %c0_12, %c0_13], %28 {strides = array<i32>} : memref<1x1x128xf32, #tpu.memory_space<vmem>>, vector<1x1x128xf32>,
    } else {
    }
    %c0_i32_8 = arith.constant 0 : i32
    %24 = arith.cmpi eq, %arg0, %c0_i32_8 : i32
    %25 = arith.extui %24 : i1 to i32
    %c0_i32_9 = arith.constant 0 : i32
    %26 = arith.cmpi ne, %25, %c0_i32_9 : i32
    scf.if %26 {
      %27 = tpu.iota {dimensions = array<i32: 0>} : vector<20x128xi32>
      %c20_i32 = arith.constant 20 : i32
      %28 = arith.muli %arg0, %c20_i32 : i32
      %29 = vector.broadcast %28 : i32 to vector<20x128xi32>
      %30 = arith.addi %27, %29 : vector<20x128xi32>
      %31 = tpu.iota {dimensions = array<i32: 1>} : vector<20x128xi32>
      %c128_i32 = arith.constant 128 : i32
      %32 = vector.broadcast %c128_i32 : i32 to vector<20x128xi32>
      %33 = arith.muli %30, %32 : vector<20x128xi32>
      %34 = arith.addi %33, %31 : vector<20x128xi32>
      %c2500_i32 = arith.constant 2500 : i32
      %35 = vector.broadcast %c2500_i32 : i32 to vector<20x128xi32>
      %36 = arith.cmpi slt, %34, %35 : vector<20x128xi32>
      %cst_10 = arith.constant 0.000000e+00 : f32
      %37 = vector.broadcast %cst_10 : f32 to vector<20x128xf32>
      %38 = arith.select %36, %20, %37 : vector<20x128xi1>, vector<20x128xf32>
      %cst_11 = arith.constant dense<0.000000e+00> : vector<128xf32>
      %39 = vector.multi_reduction <add>, %38, %cst_11 [0] : vector<20x128xf32> to vector<128xf32>
      %40 = vector.shape_cast %39 : vector<128xf32> to vector<1x1x128xf32>
      %c0_12 = arith.constant 0 : index
      %c0_13 = arith.constant 0 : index
      %c0_14 = arith.constant 0 : index
      %41 = vector.load %arg3[%c0_12, %c0_13, %c0_14] : memref<1x1x128xf32, #tpu.memory_space<vmem>>, vector<1x1x128xf32>
      tpu.vector_store %arg3[%c0_12, %c0_13, %c0_14], %40 {strides = array<i32>} : memref<1x1x128xf32, #tpu.memory_space<vmem>>, vector<1x1x128xf32>,
    } else {
    }
    return
  }
  func.func @transform_0(%arg0: i32) -> (i32, i32) {
    %c0_i32 = arith.constant 0 : i32
    %c0_i32_0 = arith.constant 0 : i32
    return %arg0, %c0_i32 : i32, i32
  }
  func.func @transform_1(%arg0: i32) -> (i32, i32) {
    %c0_i32 = arith.constant 0 : i32
    %c0_i32_0 = arith.constant 0 : i32
    return %arg0, %c0_i32 : i32, i32
  }
  func.func @transform_2(%arg0: i32) -> (i32, i32, i32) {
    %c0_i32 = arith.constant 0 : i32
    %c0_i32_0 = arith.constant 0 : i32
    %c0_i32_1 = arith.constant 0 : i32
    return %arg0, %c0_i32, %c0_i32_0 : i32, i32, i32
  }
}

</mosaic_0001>

<llo_original>
// kernel: tpu_custom_call.1
$region0: #{tpu_custom_call.1}
  #allocation0 [shape = 'u32[]', space=smem, size = 0x4, offset = 0x4, fixed_abs, tag = 'smem constant byte address 0x4 - core index']
  #allocation1 [shape = 'u32[144,128]{1,0:T(1,128)}', space=vmem, size = 0x12000, scoped, tag = 'internal scratch']
  %s0 = inlined_call_operand.hbm [shape: f32[20,128], index: 0, kind: input, shape index: {}]
  %s1 = inlined_call_operand.hbm [shape: f32[20,128], index: 1, kind: input, shape index: {}]
  %s2 = inlined_call_operand.hbm [shape: f32[1,1,128], index: 2, kind: output, shape index: {}]
  %s3 = sld [smem:[#allocation0]]
  $region34: #{tpu_custom_call.1} parent=0
    _
  %s5 = ssub.s32 1, %s3
  %s6 = scalar_select 0, %s5, %s3
  $region1: #{tpu_custom_call.1} parent=0
    #allocation2 [shape = 'u8[12288]{0}', space=vmem, size = 0x3000, scoped, tag = 'input window, operand 0, single buffered']
    #allocation3 [shape = 's32[1]{0}', space=sflag, size = 0x4, scoped, tag = 'scoped memory for tpu_custom_call.1']
    #allocation4 [shape = 's32[1]{0}', space=sflag, size = 0x4, scoped, tag = 'scoped memory for tpu_custom_call.1']
    #allocation5 [shape = 'u8[12288]{0}', space=vmem, size = 0x3000, scoped, tag = 'input window, operand 1, single buffered']
    #allocation6 [shape = 's32[1]{0}', space=sflag, size = 0x4, scoped, tag = 'scoped memory for tpu_custom_call.1']
    #allocation7 [shape = 'u8[512]{0}', space=vmem, size = 0x400, scoped, tag = 'output window, operand 0, single buffered']
    %7 = vsyncpa [#allocation3], 0
    %8 = vsyncpa [#allocation6], 0
    %9 = vsyncpa [#allocation4], 0
    // Predicated region
    $region2: #{tpu_custom_call.1} parent=1 // pred_check
      _
    $region3: #{tpu_custom_call.1} parent=1 // pred_check_branch
      %11 = sbr.rel (0) target = $region5
    $region4: #{tpu_custom_call.1} parent=1 // pred_region
      %s13 = ssub.s32 384, 384
      %14 = vsyncadd [#allocation3], %s13
      %s15 = sshll.u32 [#allocation2], 4
      %s16 = int_to_ptr.vmem [resolvable:$true] %s15
      %21 = dma.hbm_to_vmem [thread:$0]  %s0, 384, %s16, [#allocation3], 128, 128, 8
    $region5: #{tpu_custom_call.1} parent=1 // pred_fallthru
      _
    // Predicated region
    $region6: #{tpu_custom_call.1} parent=1 // pred_check
      _
    $region7: #{tpu_custom_call.1} parent=1 // pred_check_branch
      %23 = sbr.rel (0) target = $region9
    $region8: #{tpu_custom_call.1} parent=1 // pred_region
      %s25 = ssub.s32 384, 384
      %26 = vsyncadd [#allocation6], %s25
      %s27 = sshll.u32 [#allocation5], 4
      %s28 = int_to_ptr.vmem [resolvable:$true] %s27
      %33 = dma.hbm_to_vmem [thread:$0]  %s1, 384, %s28, [#allocation6], 128, 128, 8
    $region9: #{tpu_custom_call.1} parent=1 // pred_fallthru
      _
    // Predicated region
    $region10: #{tpu_custom_call.1} parent=1 // pred_check
      _
    $region11: #{tpu_custom_call.1} parent=1 // pred_check_branch
      %35 = sbr.rel (0) target = $region13
    $region12: #{tpu_custom_call.1} parent=1 // pred_region
      %36 = dma.done [#allocation3], 384
    $region13: #{tpu_custom_call.1} parent=1 // pred_fallthru
      _
    // Predicated region
    $region14: #{tpu_custom_call.1} parent=1 // pred_check
      _
    $region15: #{tpu_custom_call.1} parent=1 // pred_check_branch
      %38 = sbr.rel (0) target = $region17
    $region16: #{tpu_custom_call.1} parent=1 // pred_region
      %39 = dma.done [#allocation6], 384
    $region17: #{tpu_custom_call.1} parent=1 // pred_fallthru
      _
    %v40 = vld [vmem:[#allocation2] sm:$0xff]
    %v41 = vld [vmem:[#allocation2 + $0x8] sm:$0xff]
    %v42 = vld [vmem:[#allocation2 + $0x10] sm:$0xf]
    %v43 = vld [vmem:[#allocation5] sm:$0xff]
    %v44 = vld [vmem:[#allocation5 + $0x8] sm:$0xff]
    %v45 = vld [vmem:[#allocation5 + $0x10] sm:$0xf]
    %v46 = vand.u32 2147483647, %v40
    %v47 = vand.u32 2147483647, %v41
    %v48 = vand.u32 2147483647, %v42
    %v49 = vsub.f32 0.0, %v46
    %v50 = vsub.f32 0.0, %v47
    %v51 = vsub.f32 0.0, %v48
    %v52 = vmul.f32 %v49, 1.442695
    %v53 = vpow.pop %v52
    %v54 = vmul.f32 %v50, 1.442695
    %v55 = vpow.pop %v54
    %v56 = vmul.f32 %v51, 1.442695
    %v57 = vpow.pop %v56
    %v58 = vmax.f32 %v40, 0.0
    %v59 = vmax.f32 %v41, 0.0
    %v60 = vmax.f32 %v42, 0.0
    %v61 = vmul.f32 %v40, %v43
    %v62 = vmul.f32 %v41, %v44
    %v63 = vmul.f32 %v42, %v45
    %v64 = vsub.f32 %v58, %v61
    %v65 = vsub.f32 %v59, %v62
    %v66 = vsub.f32 %v60, %v63
    %v67 = vadd.f32 %v53, 1.0
    %v68 = vlog2.pop %v67
    %v69 = vmul.f32 %v68, 0.6931472
    %v70 = vmul.f32 -0.5, %v53
    %v71 = vadd.f32 %v70, 1.0
    %v72 = vmul.f32 %v71, %v53
    %v73 = vand.u32 2147483647, %v53
    %vm74 = vcmp.lt.f32.partialorder %v73, 0.0004427343
    %v75 = vsel %vm74, %v72, %v69
    %v76 = vadd.f32 %v55, 1.0
    %v77 = vlog2.pop %v76
    %v78 = vmul.f32 %v77, 0.6931472
    %v79 = vmul.f32 -0.5, %v55
    %v80 = vadd.f32 %v79, 1.0
    %v81 = vmul.f32 %v80, %v55
    %v82 = vand.u32 2147483647, %v55
    %vm83 = vcmp.lt.f32.partialorder %v82, 0.0004427343
    %v84 = vsel %vm83, %v81, %v78
    %v85 = vadd.f32 %v57, 1.0
    %v86 = vlog2.pop %v85
    %v87 = vmul.f32 %v86, 0.6931472
    %v88 = vmul.f32 -0.5, %v57
    %v89 = vadd.f32 %v88, 1.0
    %v90 = vmul.f32 %v89, %v57
    %v91 = vand.u32 2147483647, %v57
    %vm92 = vcmp.lt.f32.partialorder %v91, 0.0004427343
    %v93 = vsel %vm92, %v90, %v87
    %v94 = vadd.f32 %v64, %v75
    %v95 = vadd.f32 %v65, %v84
    %v96 = vadd.f32 %v66, %v93
    %v97 = vsub.f32 0.0, %v94
    %v98 = vsub.f32 0.0, %v95
    %v99 = vsub.f32 0.0, %v96
    %v100 = vmul.f32 %v97, 1.442695
    %v101 = vpow.pop %v100
    %v102 = vmul.f32 %v98, 1.442695
    %v103 = vpow.pop %v102
    %v104 = vmul.f32 %v99, 1.442695
    %v105 = vpow.pop %v104
    %v106 = vsub.f32 1.0, %v101
    %v107 = vsub.f32 1.0, %v103
    %v108 = vsub.f32 1.0, %v105
    %v109 = vmul.f32 %v106, %v106
    %v110 = vmul.f32 %v107, %v107
    %v111 = vmul.f32 %v108, %v108
    %v112 = vmul.f32 %v109, %v94
    %v113 = vmul.f32 %v110, %v95
    %v114 = vmul.f32 %v111, %v96
    %p115 = scmp.ne.s32.totalorder 0, 0
    // Predicated region
    $region18: #{tpu_custom_call.1} parent=1 // pred_check
      %p116 = pneg %p115
    $region19: #{tpu_custom_call.1} parent=1 // pred_check_branch
      %118 = sbr.rel (%p116) target = $region21
    $region20: #{tpu_custom_call.1} parent=1 // pred_region
      %v119 = vadd.f32 %v112, %v113
      %vm120 = vcmask 1043456
      %v121 = vsel %vm120, %v114, 0.0
      %v122 = vadd.f32 %v119, %v121
      %v123 = vrot.slane %v122, 4
      %v124 = vadd.f32 %v122, %v123
      %v125 = vrot.slane %v124, 2
      %v126 = vadd.f32 %v124, %v125
      %v127 = vrot.slane %v126, 1
      %v128 = vadd.f32 %v126, %v127
      %129 = vst [vmem:[#allocation7] sm:$0x1] %v128
    $region21: #{tpu_custom_call.1} parent=1 // pred_fallthru
      _
    %p130 = scmp.eq.s32.totalorder 0, 0
    // Predicated region
    $region22: #{tpu_custom_call.1} parent=1 // pred_check
      %p131 = pneg %p130
    $region23: #{tpu_custom_call.1} parent=1 // pred_check_branch
      %133 = sbr.rel (%p131) target = $region25
    $region24: #{tpu_custom_call.1} parent=1 // pred_region
      %v134 = vlaneseq
      %v135 = vshrl.u32 %v134, 7
      %v136 = vadd.s32 %v135, 8
      %v137 = vadd.s32 %v135, 16
      %s138 = smul.u32 0, 20
      %v139 = vstv %s138
      %v140 = vadd.s32 %v135, %v139
      %v141 = vadd.s32 %v136, %v139
      %v142 = vadd.s32 %v137, %v139
      %v143 = vlaneseq
      %v144 = vand.u32 %v143, 127
      %v145 = vmul.u32 %v140, 128
      %v146 = vmul.u32 %v141, 128
      %v147 = vmul.u32 %v142, 128
      %v148 = vadd.s32 %v145, %v144
      %v149 = vadd.s32 %v146, %v144
      %v150 = vadd.s32 %v147, %v144
      %vm151 = vcmp.lt.s32.totalorder %v148, 2500
      %vm152 = vcmp.lt.s32.totalorder %v149, 2500
      %vm153 = vcmp.lt.s32.totalorder %v150, 2500
      %v154 = vsel %vm151, %v112, 0.0
      %v155 = vsel %vm152, %v113, 0.0
      %v156 = vsel %vm153, %v114, 0.0
      %v157 = vadd.f32 %v154, %v155
      %vm158 = vcmask 1043456
      %v159 = vsel %vm158, %v156, 0.0
      %v160 = vadd.f32 %v157, %v159
      %v161 = vrot.slane %v160, 4
      %v162 = vadd.f32 %v160, %v161
      %v163 = vrot.slane %v162, 2
      %v164 = vadd.f32 %v162, %v163
      %v165 = vrot.slane %v164, 1
      %v166 = vadd.f32 %v164, %v165
      %167 = vst [vmem:[#allocation7] sm:$0x1] %v166
    $region25: #{tpu_custom_call.1} parent=1 // pred_fallthru
      _
    // Predicated region
    $region26: #{tpu_custom_call.1} parent=1 // pred_check
      _
    $region27: #{tpu_custom_call.1} parent=1 // pred_check_branch
      %169 = sbr.rel (0) target = $region29
    $region28: #{tpu_custom_call.1} parent=1 // pred_region
      %s171 = ssub.s32 16, 16
      %172 = vsyncadd [#allocation4], %s171
      %s174 = sshll.u32 [#allocation7], 4
      %s175 = int_to_ptr.vmem [resolvable:$true] %s174
      %177 = dma.vmem_to_hbm [thread:$0]  %s175, 16, %s2, [#allocation4]
    $region29: #{tpu_custom_call.1} parent=1 // pred_fallthru
      _
    // Predicated region
    $region30: #{tpu_custom_call.1} parent=1 // pred_check
      _
    $region31: #{tpu_custom_call.1} parent=1 // pred_check_branch
      %179 = sbr.rel (0) target = $region33
    $region32: #{tpu_custom_call.1} parent=1 // pred_region
      %180 = dma.done [#allocation4], 16
    $region33: #{tpu_custom_call.1} parent=1 // pred_fallthru
      _
    %181 = vsyncpa [#allocation3], 1
    %182 = vsyncpa [#allocation6], 1
    %183 = vsyncpa [#allocation4], 1

</llo_original>
